<compile_context>
chip_gen: v7x
topology: tpu7x:2x2x1
jax: 0.10.0
libtpu: 0.0.40
codegen_flags: <defaults>
</compile_context>

<pallas_src>
from functools import lru_cache

import numpy as np
import jax
import jax.numpy as jnp
from jax.experimental import pallas as pl
from jax.experimental.pallas import tpu as pltpu


# ----------------------------- helpers / weights (host glue) -----------------------------

def _cdiv(a, b):
    return (a + b - 1) // b


def _round_up(a, b):
    return _cdiv(a, b) * b


def _hann_periodic(n):
    # librosa.filters.get_window('hann', n, fftbins=True) == periodic hann
    k = np.arange(n)
    return 0.5 - 0.5 * np.cos(2.0 * np.pi * k / n)


@lru_cache(maxsize=None)
def _stft_weight_np(n_fft, win_length, f_pad):
    """Combined lane-padded weight (n_fft, 2*f_pad) f32:
    cols [0:F) = windowed real DFT basis, [f_pad:f_pad+F) = imag basis, rest zero."""
    f_out = n_fft // 2 + 1
    win = _hann_periodic(win_length)
    # librosa.util.pad_center(win, n_fft)
    lpad = (n_fft - win_length) // 2
    win = np.pad(win, (lpad, n_fft - win_length - lpad))
    x, y = np.meshgrid(np.arange(n_fft), np.arange(n_fft))
    # numerically exact DFT matrix (avoids np.power phase drift for large n_fft)
    W = np.exp(-2j * np.pi * ((x * y) % n_fft) / n_fft)
    WB = W[:, :f_out] * win[:, None]                       # (n_fft, F) complex
    Wc = np.zeros((n_fft, 2 * f_pad), dtype=np.float32)
    Wc[:, :f_out] = np.real(WB).astype(np.float32)
    Wc[:, f_pad:f_pad + f_out] = np.imag(WB).astype(np.float32)
    return Wc


def get_stft_weight(n_fft, win_length, f_pad, dtype=jnp.float32):
    return jnp.asarray(_stft_weight_np(n_fft, win_length, f_pad), dtype=dtype)


def _vmem_capacity_bytes():
    try:
        return int(pltpu.get_tpu_info().vmem_capacity_bytes)
    except Exception:
        return 64 * 1024 * 1024        # conservative default (v7x per-core VMEM)


# ----------------------------- Pallas kernel -----------------------------

def _stft_kernel(sig_ref, w_ref, real_ref, imag_ref, frames_ref):
    # sig_ref    : (n_rows, hop)    VMEM, whole padded signal of batch b (resident across i)
    # w_ref      : (n_fft, 2*f_pad) VMEM, combined [real | imag] windowed DFT basis
    # real_ref   : (TM, f_pad)      output block for (batch b, time-tile i)
    # imag_ref   : (TM, f_pad)
    # frames_ref : (TM, n_fft)      scratch: the implicit conv1d frames for this tile
    i = pl.program_id(1)
    TM, f_pad = real_ref.shape
    n_fft = w_ref.shape[0]
    hop = sig_ref.shape[1]
    R = n_fft // hop                               # frames overlap by R-1 rows

    # Build the (TM, n_fft) frame tile: frame t covers rows [t, t+R) of the (row, hop)
    # view, so frames[:, r*hop:(r+1)*hop] = sig[i*TM + r : i*TM + r + TM, :].
    row0 = pl.multiple_of(i * TM, 8)
    for r in range(R):                             # R is small and static (default 4)
        frames_ref[:, r * hop:(r + 1) * hop] = sig_ref[pl.ds(row0 + r, TM), :]

    # One long-K MXU matmul; accumulation stays inside the MXU result buffer.
    acc = jnp.dot(frames_ref[...], w_ref[...], preferred_element_type=jnp.float32)
    real_ref[...] = acc[:, :f_pad]                 # lane-aligned splits (f_pad % 128 == 0)
    imag_ref[...] = acc[:, f_pad:]


# ----------------------------- wrapper -----------------------------

def stft_pallas(x, n_fft=2048, hop_length=None, win_length=None, window="hann",
                center=True, pad_mode="reflect", use_bf16=False):
    """x: (B, L) float32. Returns (real, imag), each (B, 1, T, F) float32,
    matching the PyTorch STFT module (T = L//hop + 1, F = n_fft//2 + 1)."""
    assert window == "hann"
    assert pad_mode in ("constant", "reflect")
    if win_length is None:
        win_length = n_fft
    if hop_length is None:
        hop_length = win_length // 4
    assert hop_length <= n_fft and n_fft % hop_length == 0, \
        "Pallas fast path requires hop_length dividing n_fft"
    # TODO(synk): hop_length < 128 under-fills vreg lanes / DMA sublanes (e.g. the tiny
    #             demo config) -- correct but slow; the default hop = n_fft//4 is lane-dense.

    compute_dtype = jnp.bfloat16 if use_bf16 else jnp.float32
    bytes_per = 2 if use_bf16 else 4

    f_out = n_fft // 2 + 1
    f_pad = _round_up(f_out, 128)       # 128-aligned so the imag half starts on a lane tile
    w2 = 2 * f_pad

    B, L = x.shape
    x = x.astype(jnp.float32)
    if center:
        pad = n_fft // 2
        mode = "reflect" if pad_mode == "reflect" else "constant"
        x = jnp.pad(x, ((0, 0), (pad, pad)), mode=mode)
    Lp = x.shape[1]
    assert Lp >= n_fft, "signal too short for a single frame"
    T = (Lp - n_fft) // hop_length + 1
    R = n_fft // hop_length

    # --- balanced time tiling (don't pad T up to a full max-tile multiple) ---
    vmem_cap = _vmem_capacity_bytes()
    tm_max = 512 if vmem_cap >= (100 << 20) else 256   # v5e/v6e (128 MiB VMEM) -> bigger tiles
    if T <= tm_max:
        TM = _round_up(T, 8)
        n_tiles = 1
    else:
        n_tiles = _cdiv(T, tm_max)
        TM = _round_up(_cdiv(T, n_tiles), 8)
        n_tiles = _cdiv(T, TM)
    T_pad = n_tiles * TM

    # Zero-pad so every tile's [i*TM, i*TM + TM + R - 1) row window is in bounds, then
    # view the signal as (B, n_rows, hop).  The whole per-batch signal is kept resident
    # in VMEM across the time tiles (auto-pipelined DMA; no manual start/wait).
    # TODO(synk): for very long signals (> a few MiB per batch) chunk the row axis with a
    #             haloed extra grid dimension instead of keeping it fully resident.
    n_rows = max(T_pad + R - 1, _cdiv(Lp, hop_length))
    total = n_rows * hop_length
    x = jnp.pad(x, ((0, 0), (0, total - Lp)))
    x3 = x.reshape(B, n_rows, hop_length).astype(compute_dtype)

    Wc = get_stft_weight(n_fft, win_length, f_pad, dtype=compute_dtype)    # (n_fft, 2*f_pad)

    # VMEM budget: the pipeline double-buffers the signal, weights and both outputs.
    # TODO(synk): for n_fft >= 4096 in f32 the double-buffered weight no longer fits a v7x
    #             core; tile the F axis as a third grid dim or pass use_bf16=True there.
    vmem_need = (
        2 * n_fft * w2 * bytes_per                 # weights (x2 pipeline buffers)
        + 2 * n_rows * hop_length * bytes_per      # resident per-batch signal (x2 buffers)
        + 2 * 2 * TM * f_pad * 4                   # real+imag f32 output blocks (x2 buffers)
        + TM * n_fft * bytes_per                   # frames scratch
    )
    vmem_limit = max(32 << 20, int(vmem_need * 1.25) + (4 << 20))
    vmem_limit = min(vmem_limit, vmem_cap, 128 << 20)

    real_p, imag_p = pl.pallas_call(
        _stft_kernel,
        out_shape=(jax.ShapeDtypeStruct((B, T_pad, f_pad), jnp.float32),
                   jax.ShapeDtypeStruct((B, T_pad, f_pad), jnp.float32)),
        grid_spec=pltpu.PrefetchScalarGridSpec(
            num_scalar_prefetch=0,
            grid=(B, n_tiles),
            in_specs=[
                # whole padded signal of batch b; block index constant across i -> resident
                pl.BlockSpec((None, n_rows, hop_length), lambda b, i: (b, 0, 0)),
                # combined [real | imag] weights; constant block index
                pl.BlockSpec((n_fft, w2), lambda b, i: (0, 0)),
            ],
            out_specs=[
                pl.BlockSpec((None, TM, f_pad), lambda b, i: (b, i, 0)),
                pl.BlockSpec((None, TM, f_pad), lambda b, i: (b, i, 0)),
            ],
            scratch_shapes=[
                pltpu.VMEM((TM, n_fft), compute_dtype),    # frame tile scratch
            ],
        ),
        compiler_params=pltpu.CompilerParams(
            dimension_semantics=("parallel", "arbitrary"),
            vmem_limit_bytes=vmem_limit,
        ),
        cost_estimate=pl.CostEstimate(
            flops=2 * B * T_pad * n_fft * w2,
            transcendentals=0,
            bytes_accessed=(B * n_rows * hop_length * bytes_per
                            + n_fft * w2 * bytes_per
                            + 2 * B * T_pad * f_pad * 4),
        ),
    )(x3, Wc)

    # Only lane-aligned trims remain (imag no longer needs a strided mid-array slice).
    real = real_p[:, :T, :f_out][:, None, :, :]
    imag = imag_p[:, :T, :f_out][:, None, :, :]
    return real, imag


# ----------------------------- reference (pure JAX) -----------------------------

def stft_reference(x, n_fft=2048, hop_length=None, win_length=None,
                   center=True, pad_mode="reflect"):
    if win_length is None:
        win_length = n_fft
    if hop_length is None:
        hop_length = win_length // 4
    f_out = n_fft // 2 + 1
    f_pad = _round_up(f_out, 128)
    B, L = x.shape
    x = x.astype(jnp.float32)
    if center:
        pad = n_fft // 2
        mode = "reflect" if pad_mode == "reflect" else "constant"
        x = jnp.pad(x, ((0, 0), (pad, pad)), mode=mode)
    Lp = x.shape[1]
    T = (Lp - n_fft) // hop_length + 1
    idx = jnp.arange(T)[:, None] * hop_length + jnp.arange(n_fft)[None, :]
    frames = x[:, idx]                                    # (B, T, n_fft)
    Wc = np.asarray(_stft_weight_np(n_fft, win_length, f_pad))
    Wr = jnp.asarray(Wc[:, :f_out])
    Wi = jnp.asarray(Wc[:, f_pad:f_pad + f_out])
    real = jnp.einsum("btn,nf->btf", frames, Wr, precision="highest")[:, None, :, :]
    imag = jnp.einsum("btn,nf->btf", frames, Wi, precision="highest")[:, None, :, :]
    return real, imag


# ----------------------------- main -----------------------------

if __name__ == "__main__":
    key = jax.random.PRNGKey(0)
    B, L = 2, 128
    n_fft, hop = 64, 16
    x = jax.random.normal(key, (B, L), dtype=jnp.float32)

    real, imag = stft_pallas(x, n_fft=n_fft, hop_length=hop,
                             center=True, pad_mode="reflect")
    jax.block_until_ready((real, imag))

    real_ref, imag_ref = stft_reference(x, n_fft=n_fft, hop_length=hop,
                                        center=True, pad_mode="reflect")
    T = L // hop + 1
    F_out = n_fft // 2 + 1
    assert real.shape == (B, 1, T, F_out), real.shape
    assert imag.shape == (B, 1, T, F_out), imag.shape
    np.testing.assert_allclose(np.asarray(real), np.asarray(real_ref),
                               rtol=1e-3, atol=1e-3)
    np.testing.assert_allclose(np.asarray(imag), np.asarray(imag_ref),
                               rtol=1e-3, atol=1e-3)

    print("KERNEL_OK")
</pallas_src>

<mosaic_0001>
module attributes {stable_mosaic.version = 11 : i64} {
  func.func @_stft_kernel(%arg0: i32, %arg1: i32, %arg2: memref<1x19x16xf32, #tpu.memory_space<vmem>>, %arg3: memref<64x256xf32, #tpu.memory_space<vmem>>, %arg4: memref<1x16x128xf32, #tpu.memory_space<vmem>>, %arg5: memref<1x16x128xf32, #tpu.memory_space<vmem>>, %arg6: memref<16x64xf32, #tpu.memory_space<vmem>>) attributes {dimension_semantics = [#tpu.dimension_semantics<parallel>, #tpu.dimension_semantics<arbitrary>], iteration_bounds = array<i64: 2, 1>, scalar_prefetch = 0 : i64, scratch_operands = 1 : i64, tpu.core_type = #tpu.core_type<tc>, window_params = [{transform_indices = @transform_0, window_bounds = array<i64: 1, 19, 16>}, {pipeline_mode = #tpu.pipeline_mode<synchronous>, transform_indices = @transform_1, window_bounds = array<i64: 64, 256>}, {transform_indices = @transform_2, window_bounds = array<i64: 1, 16, 128>}, {transform_indices = @transform_3, window_bounds = array<i64: 1, 16, 128>}]} {
    %c16_i32 = arith.constant 16 : i32
    %0 = arith.muli %arg1, %c16_i32 : i32
    %1 = tpu.assume_multiple %0, 8 : i32
    %c0_i32 = arith.constant 0 : i32
    %2 = arith.addi %1, %c0_i32 : i32
    %c0 = arith.constant 0 : index
    %3 = arith.index_cast %2 : i32 to index
    %c0_0 = arith.constant 0 : index
    %4 = vector.load %arg2[%c0, %3, %c0_0] : memref<1x19x16xf32, #tpu.memory_space<vmem>>, vector<1x16x16xf32>
    %5 = vector.shape_cast %4 : vector<1x16x16xf32> to vector<16x16xf32>
    %c0_1 = arith.constant 0 : index
    %c0_2 = arith.constant 0 : index
    %6 = vector.load %arg6[%c0_1, %c0_2] : memref<16x64xf32, #tpu.memory_space<vmem>>, vector<16x16xf32>
    tpu.vector_store %arg6[%c0_1, %c0_2], %5 {strides = array<i32>} : memref<16x64xf32, #tpu.memory_space<vmem>>, vector<16x16xf32>,
    %c1_i32 = arith.constant 1 : i32
    %7 = arith.addi %1, %c1_i32 : i32
    %c0_3 = arith.constant 0 : index
    %8 = arith.index_cast %7 : i32 to index
    %c0_4 = arith.constant 0 : index
    %9 = vector.load %arg2[%c0_3, %8, %c0_4] : memref<1x19x16xf32, #tpu.memory_space<vmem>>, vector<1x16x16xf32>
    %10 = vector.shape_cast %9 : vector<1x16x16xf32> to vector<16x16xf32>
    %c0_5 = arith.constant 0 : index
    %c16 = arith.constant 16 : index
    %11 = vector.load %arg6[%c0_5, %c16] : memref<16x64xf32, #tpu.memory_space<vmem>>, vector<16x16xf32>
    tpu.vector_store %arg6[%c0_5, %c16], %10 {strides = array<i32>} : memref<16x64xf32, #tpu.memory_space<vmem>>, vector<16x16xf32>,
    %c2_i32 = arith.constant 2 : i32
    %12 = arith.addi %1, %c2_i32 : i32
    %c0_6 = arith.constant 0 : index
    %13 = arith.index_cast %12 : i32 to index
    %c0_7 = arith.constant 0 : index
    %14 = vector.load %arg2[%c0_6, %13, %c0_7] : memref<1x19x16xf32, #tpu.memory_space<vmem>>, vector<1x16x16xf32>
    %15 = vector.shape_cast %14 : vector<1x16x16xf32> to vector<16x16xf32>
    %c0_8 = arith.constant 0 : index
    %c32 = arith.constant 32 : index
    %16 = vector.load %arg6[%c0_8, %c32] : memref<16x64xf32, #tpu.memory_space<vmem>>, vector<16x16xf32>
    tpu.vector_store %arg6[%c0_8, %c32], %15 {strides = array<i32>} : memref<16x64xf32, #tpu.memory_space<vmem>>, vector<16x16xf32>,
    %c3_i32 = arith.constant 3 : i32
    %17 = arith.addi %1, %c3_i32 : i32
    %c0_9 = arith.constant 0 : index
    %18 = arith.index_cast %17 : i32 to index
    %c0_10 = arith.constant 0 : index
    %19 = vector.load %arg2[%c0_9, %18, %c0_10] : memref<1x19x16xf32, #tpu.memory_space<vmem>>, vector<1x16x16xf32>
    %20 = vector.shape_cast %19 : vector<1x16x16xf32> to vector<16x16xf32>
    %c0_11 = arith.constant 0 : index
    %c48 = arith.constant 48 : index
    %21 = vector.load %arg6[%c0_11, %c48] : memref<16x64xf32, #tpu.memory_space<vmem>>, vector<16x16xf32>
    tpu.vector_store %arg6[%c0_11, %c48], %20 {strides = array<i32>} : memref<16x64xf32, #tpu.memory_space<vmem>>, vector<16x16xf32>,
    %c0_12 = arith.constant 0 : index
    %c0_13 = arith.constant 0 : index
    %22 = vector.load %arg6[%c0_12, %c0_13] : memref<16x64xf32, #tpu.memory_space<vmem>>, vector<16x64xf32>
    %c0_14 = arith.constant 0 : index
    %c0_15 = arith.constant 0 : index
    %23 = vector.load %arg3[%c0_14, %c0_15] : memref<64x256xf32, #tpu.memory_space<vmem>>, vector<64x256xf32>
    %cst = arith.constant dense<0.000000e+00> : vector<16x256xf32>
    %24 = tpu.matmul %22, %23, %cst {dimension_numbers = #tpu.dot_dimension_numbers<[1], [0], [0], [1], [0, 0, 1, 1], [], []>} : vector<16x64xf32>, vector<64x256xf32>, vector<16x256xf32> -> vector<16x256xf32>
    %25 = vector.extract_strided_slice %24 {offsets = [0, 0], sizes = [16, 128], strides = [1, 1]} : vector<16x256xf32> to vector<16x128xf32>
    %c0_16 = arith.constant 0 : index
    %c0_17 = arith.constant 0 : index
    %c0_18 = arith.constant 0 : index
    %26 = vector.load %arg4[%c0_16, %c0_17, %c0_18] : memref<1x16x128xf32, #tpu.memory_space<vmem>>, vector<1x16x128xf32>
    %27 = vector.shape_cast %26 : vector<1x16x128xf32> to vector<16x128xf32>
    %28 = vector.shape_cast %25 : vector<16x128xf32> to vector<1x16x128xf32>
    tpu.vector_store %arg4[%c0_16, %c0_17, %c0_18], %28 {strides = array<i32>} : memref<1x16x128xf32, #tpu.memory_space<vmem>>, vector<1x16x128xf32>,
    %29 = vector.extract_strided_slice %24 {offsets = [0, 128], sizes = [16, 128], strides = [1, 1]} : vector<16x256xf32> to vector<16x128xf32>
    %c0_19 = arith.constant 0 : index
    %c0_20 = arith.constant 0 : index
    %c0_21 = arith.constant 0 : index
    %30 = vector.load %arg5[%c0_19, %c0_20, %c0_21] : memref<1x16x128xf32, #tpu.memory_space<vmem>>, vector<1x16x128xf32>
    %31 = vector.shape_cast %30 : vector<1x16x128xf32> to vector<16x128xf32>
    %32 = vector.shape_cast %29 : vector<16x128xf32> to vector<1x16x128xf32>
    tpu.vector_store %arg5[%c0_19, %c0_20, %c0_21], %32 {strides = array<i32>} : memref<1x16x128xf32, #tpu.memory_space<vmem>>, vector<1x16x128xf32>,
    return
  }
  func.func @transform_0(%arg0: i32, %arg1: i32) -> (i32, i32, i32) {
    %c0_i32 = arith.constant 0 : i32
    %c0_i32_0 = arith.constant 0 : i32
    %c0_i32_1 = arith.constant 0 : i32
    return %arg0, %c0_i32, %c0_i32_0 : i32, i32, i32
  }
  func.func @transform_1(%arg0: i32, %arg1: i32) -> (i32, i32) {
    %c0_i32 = arith.constant 0 : i32
    %c0_i32_0 = arith.constant 0 : i32
    %c0_i32_1 = arith.constant 0 : i32
    return %c0_i32, %c0_i32_0 : i32, i32
  }
  func.func @transform_2(%arg0: i32, %arg1: i32) -> (i32, i32, i32) {
    %c0_i32 = arith.constant 0 : i32
    %c0_i32_0 = arith.constant 0 : i32
    return %arg0, %arg1, %c0_i32 : i32, i32, i32
  }
  func.func @transform_3(%arg0: i32, %arg1: i32) -> (i32, i32, i32) {
    %c0_i32 = arith.constant 0 : i32
    %c0_i32_0 = arith.constant 0 : i32
    return %arg0, %arg1, %c0_i32 : i32, i32, i32
  }
}

</mosaic_0001>

<llo_original>
// kernel: tpu_custom_call.1
$region0: #{tpu_custom_call.1}
  #allocation0 [shape = 'u32[]', space=smem, size = 0x4, offset = 0x4, fixed_abs, tag = 'smem constant byte address 0x4 - core index']
  #allocation1 [shape = 'u32[144,128]{1,0:T(1,128)}', space=vmem, size = 0x12000, scoped, tag = 'internal scratch']
  #allocation2 [shape = 'f32[16,64]{1,0:T(8,128)}', space=vmem, size = 0x2000, scoped, tag = 'scratch operand']
  %s0 = inlined_call_operand.vmem [shape: f32[2,19,16], index: 0, kind: input, shape index: {}]
  %s1 = inlined_call_operand.hbm [shape: f32[64,256], index: 1, kind: input, shape index: {}]
  %s2 = inlined_call_operand.hbm [shape: f32[2,16,128], index: 2, kind: output, shape index: {0}]
  %s3 = inlined_call_operand.hbm [shape: f32[2,16,128], index: 3, kind: output, shape index: {1}]
  %4 = xla_tuple %s2, %s3
  %s5 = sld [smem:[#allocation0]]
  $region53: #{tpu_custom_call.1} parent=0
    _
  %s7 = ssub.s32 1, %s5
  %s8 = scalar_select 0, %s7, %s5
  $region1: #{tpu_custom_call.1} parent=0
    #allocation3 [shape = 'u8[65536]{0}', space=vmem, size = 0x10000, scoped, tag = 'input window, operand 1, single buffered']
    #allocation4 [shape = 's32[2]{0}', space=sflag, size = 0x8, scoped, tag = 'scoped memory for tpu_custom_call.1']
    #allocation5 [shape = 's32[2]{0}', space=sflag, size = 0x8, scoped, tag = 'scoped memory for tpu_custom_call.1']
    #allocation6 [shape = 'u8[16384]{0}', space=vmem, size = 0x4000, scoped, tag = 'output window, operand 0']
    #allocation7 [shape = 'u8[16384]{0}', space=vmem, size = 0x4000, scoped, tag = 'output window, operand 1']
    #allocation8 [shape = 's32[2]{0}', space=sflag, size = 0x8, scoped, tag = 'scoped memory for tpu_custom_call.1']
    %9 = vsyncpa [#allocation4], 0
    %10 = vsyncpa [#allocation5], 0
    %s11 = scalar_lea.sflag [#allocation5], 1
    %12 = vsyncpa %s11, 0
    %13 = vsyncpa [#allocation8], 0
    %s14 = scalar_lea.sflag [#allocation8], 1
    %15 = vsyncpa %s14, 0
    loop: start=0, step=1, limit=4
    $region2: #{tpu_custom_call.1} parent=1 // loop_pre_header
      _
    $region3: #{tpu_custom_call.1} parent=1 // loop_header
      %s17 = sphi 0, %s21
      %p18 = scmp.ge.s32.totalorder %s17, 4
      %s24 = sphi 0, %s36
      %s25 = sphi 0, %s32
      %s26 = sphi 0, %s24
      %s27 = sphi 0, %s25
      %s28 = sphi 0, %s26
      %s29 = sphi 0, %s27
      %s39 = sphi 0, %s41
      %s42 = sphi 0, %s39
      %s43 = sphi 0, %s42
      %s59 = sphi 0, %s43
      %s63 = sphi 0, %s63
      %s65 = sphi 0, %s63
      %s66 = sphi 0, %s65
      %s80 = sphi 0, %s66
      %s88 = sphi 0, %s90
      %s91 = sphi 0, %s88
      %s92 = sphi 0, %s91
      %s108 = sphi 0, %s92
      %s116 = sphi 0, %s118
      %s119 = sphi 0, %s116
      %s120 = sphi 0, %s119
      %s136 = sphi 0, %s120
    $region4: #{tpu_custom_call.1} parent=1 // loop_header_branch
      %20 = sbr.rel (%p18) target = $region8
    $region5: #{tpu_custom_call.1} parent=1 // loop_body
      %s22 = ssub.s32 %s17, 1
      %s23 = ssub.s32 %s17, 2
      %s30 = sadd.s32 1, %s25
      %p31 = scmp.ge.s32.totalorder %s30, 1
      %s32 = scalar_select %p31, 0, %s30
      %s33 = sadd.s32 1, %s24
      %s34 = scalar_select %p31, %s33, %s24
      %p35 = scmp.ge.s32.totalorder %s34, 2
      %s36 = scalar_select %p35, 0, %s34
      %s37 = ssub.s32 %s24, %s36
      %p38 = scmp.eq.s32.totalorder %s37, 0
      %s40 = sadd.s32 %s39, 1
      %s41 = scalar_select %p38, %s39, %s40
      %p44 = pneg %p38
      %p45 = scmp.eq.s32.totalorder %s17, 1
      %p46 = por %p44, %p45
      %p47 = scmp.ne.s32.totalorder %s39, %s42
      %p48 = scmp.eq.s32.totalorder %s17, 0
      %p49 = por %p47, %p48
      %p50 = scmp.ne.s32.totalorder %s39, %s42
      %p51 = scmp.eq.s32.totalorder %s22, 1
      %p52 = por %p50, %p51
      %p53 = scmp.ne.s32.totalorder %s42, %s43
      %p54 = scmp.eq.s32.totalorder %s22, 0
      %p55 = por %p53, %p54
      %p56 = scmp.ne.s32.totalorder %s42, %s43
      %p57 = scmp.eq.s32.totalorder %s23, 1
      %p58 = por %p56, %p57
      %p60 = scmp.ne.s32.totalorder %s43, %s59
      %p61 = scmp.eq.s32.totalorder %s23, 0
      %p62 = por %p60, %p61
      %s64 = sadd.s32 %s63, 1
      %p67 = scmp.eq.s32.totalorder %s17, 1
      %p68 = scmp.ne.s32.totalorder %s63, %s65
      %p69 = scmp.eq.s32.totalorder %s17, 0
      %p70 = por %p68, %p69
      %p71 = scmp.ne.s32.totalorder %s63, %s65
      %p72 = scmp.eq.s32.totalorder %s22, 1
      %p73 = por %p71, %p72
      %p74 = scmp.ne.s32.totalorder %s65, %s66
      %p75 = scmp.eq.s32.totalorder %s22, 0
      %p76 = por %p74, %p75
      %p77 = scmp.ne.s32.totalorder %s65, %s66
      %p78 = scmp.eq.s32.totalorder %s23, 1
      %p79 = por %p77, %p78
      %p81 = scmp.ne.s32.totalorder %s66, %s80
      %p82 = scmp.eq.s32.totalorder %s23, 0
      %p83 = por %p81, %p82
      %s84 = ssub.s32 %s24, %s36
      %s85 = ssub.s32 %s25, %s32
      %s86 = sor.u32 %s84, %s85
      %p87 = scmp.eq.s32.totalorder %s86, 0
      %s89 = sadd.s32 %s88, 1
      %s90 = scalar_select %p87, %s88, %s89
      %p93 = pneg %p87
      %p94 = scmp.eq.s32.totalorder %s17, 1
      %p95 = por %p93, %p94
      %p96 = scmp.ne.s32.totalorder %s88, %s91
      %p97 = scmp.eq.s32.totalorder %s17, 0
      %p98 = por %p96, %p97
      %p99 = scmp.ne.s32.totalorder %s88, %s91
      %p100 = scmp.eq.s32.totalorder %s22, 1
      %p101 = por %p99, %p100
      %p102 = scmp.ne.s32.totalorder %s91, %s92
      %p103 = scmp.eq.s32.totalorder %s22, 0
      %p104 = por %p102, %p103
      %p105 = scmp.ne.s32.totalorder %s91, %s92
      %p106 = scmp.eq.s32.totalorder %s23, 1
      %p107 = por %p105, %p106
      %p109 = scmp.ne.s32.totalorder %s92, %s108
      %p110 = scmp.eq.s32.totalorder %s23, 0
      %p111 = por %p109, %p110
      %s112 = ssub.s32 %s24, %s36
      %s113 = ssub.s32 %s25, %s32
      %s114 = sor.u32 %s112, %s113
      %p115 = scmp.eq.s32.totalorder %s114, 0
      %s117 = sadd.s32 %s116, 1
      %s118 = scalar_select %p115, %s116, %s117
      %p121 = pneg %p115
      %p122 = scmp.eq.s32.totalorder %s17, 1
      %p123 = por %p121, %p122
      %p124 = scmp.ne.s32.totalorder %s116, %s119
      %p125 = scmp.eq.s32.totalorder %s17, 0
      %p126 = por %p124, %p125
      %p127 = scmp.ne.s32.totalorder %s116, %s119
      %p128 = scmp.eq.s32.totalorder %s22, 1
      %p129 = por %p127, %p128
      %p130 = scmp.ne.s32.totalorder %s119, %s120
      %p131 = scmp.eq.s32.totalorder %s22, 0
      %p132 = por %p130, %p131
      %p133 = scmp.ne.s32.totalorder %s119, %s120
      %p134 = scmp.eq.s32.totalorder %s23, 1
      %p135 = por %p133, %p134
      %p137 = scmp.ne.s32.totalorder %s120, %s136
      %p138 = scmp.eq.s32.totalorder %s23, 0
      %p139 = por %p137, %p138
      %p140 = scmp.le.s32.totalorder 1, %s17
      %p141 = scmp.lt.s32.totalorder %s17, 3
      %p142 = pnand %p140, %p141
      %p143 = pneg %p142
      // Predicated region
      $region9: #{tpu_custom_call.1} parent=5 // pred_check
        _
      $region10: #{tpu_custom_call.1} parent=5 // pred_check_branch
        %145 = sbr.rel (%p142) target = $region12
      $region11: #{tpu_custom_call.1} parent=5 // pred_region
        %s146 = ssub.s32 %s17, 1
        // Predicated region
        $region13: #{tpu_custom_call.1} parent=11 // pred_check
          %p147 = pneg %p76
        $region14: #{tpu_custom_call.1} parent=11 // pred_check_branch
          %149 = sbr.rel (%p147) target = $region16
        $region15: #{tpu_custom_call.1} parent=11 // pred_region
          %s151 = ssub.s32 2048, 2048
          %152 = vsyncadd [#allocation4], %s151
          %s153 = sshll.u32 [#allocation3], 4
          %s154 = int_to_ptr.vmem [resolvable:$true] %s153
          %159 = dma.hbm_to_vmem [thread:$0]  %s1, 2048, %s154, [#allocation4], 256, 256, 16
        $region16: #{tpu_custom_call.1} parent=11 // pred_fallthru
          _
      $region12: #{tpu_custom_call.1} parent=5 // pred_fallthru
        _
      %p160 = scmp.lt.s32.totalorder %s17, 2
      // Predicated region
      $region17: #{tpu_custom_call.1} parent=5 // pred_check
        %p161 = pneg %p160
      $region18: #{tpu_custom_call.1} parent=5 // pred_check_branch
        %163 = sbr.rel (%p161) target = $region20
      $region19: #{tpu_custom_call.1} parent=5 // pred_region
        // Predicated region
        $region21: #{tpu_custom_call.1} parent=19 // pred_check
          %p164 = pneg %p49
        $region22: #{tpu_custom_call.1} parent=19 // pred_check_branch
          %166 = sbr.rel (%p164) target = $region24
        $region23: #{tpu_custom_call.1} parent=19 // pred_region
          %p167 = scmp.lt.s32.totalorder %s24, 1
          %s168 = scalar_select %p167, %s24, 1
          %s169 = smul.addr %s168, 3
          %s170 = smul.addr %s169, 8
          %s171 = scalar_lea.vmem %s0, %s170
        $region24: #{tpu_custom_call.1} parent=19 // pred_fallthru
          _
      $region20: #{tpu_custom_call.1} parent=5 // pred_fallthru
        _
      %p172 = scmp.le.s32.totalorder 1, %s17
      %p173 = scmp.lt.s32.totalorder %s17, 3
      %p174 = pnand %p172, %p173
      %p175 = pneg %p174
      // Predicated region
      $region25: #{tpu_custom_call.1} parent=5 // pred_check
        _
      $region26: #{tpu_custom_call.1} parent=5 // pred_check_branch
        %177 = sbr.rel (%p174) target = $region28
      $region27: #{tpu_custom_call.1} parent=5 // pred_region
        %s178 = ssub.s32 %s17, 1
        // Predicated region
        $region29: #{tpu_custom_call.1} parent=27 // pred_check
          %p179 = pneg %p76
        $region30: #{tpu_custom_call.1} parent=27 // pred_check_branch
          %181 = sbr.rel (%p179) target = $region32
        $region31: #{tpu_custom_call.1} parent=27 // pred_region
          %182 = dma.done [#allocation4], 2048
        $region32: #{tpu_custom_call.1} parent=27 // pred_fallthru
          _
        %p183 = scmp.lt.s32.totalorder %s26, 1
        %s184 = scalar_select %p183, %s26, 1
        %s185 = smul.addr %s184, 3
        %s186 = smul.addr %s185, 8
        %s187 = scalar_lea.vmem %s0, %s186
        %p188 = pneg %p55
        %p189 = pneg %p52
        %p190 = pneg %p76
        %p191 = pneg %p73
        %p192 = pneg %p104
        %p193 = pneg %p101
        %s194 = sand.u32 %s91, 1
        %s195 = scalar_lea.sflag [#allocation5], %s194
        %s196 = sand.u32 %s91, 1
        %s197 = smul.addr %s196, 16
        %s198 = scalar_lea.vmem [#allocation6], %s197
        %p199 = pneg %p132
        %p200 = pneg %p129
        %s201 = sand.u32 %s119, 1
        %s202 = scalar_lea.sflag [#allocation8], %s201
        %s203 = sand.u32 %s119, 1
        %s204 = smul.addr %s203, 16
        %s205 = scalar_lea.vmem [#allocation7], %s204
        %p206 = scmp.lt.s32.totalorder %s26, 1
        %s207 = scalar_select %p206, %s26, 1
        %s208 = smul.addr %s207, 3
        %s209 = smul.addr %s208, 8
        %s210 = scalar_lea.vmem %s0, %s209
        %s211 = smul.u32 2, %s27
        %s212 = smul.u32 2, %s27
        %s213 = smul.u32 %s27, 16
        %s214 = scalar_lea.vmem %s210, %s213
        %v215 = vld [vmem:[%s214] sm:$0xff]
        %v216 = vld [vmem:[%s214 + $0x8] sm:$0xff]
        %vm217 = vcmask 130048
        %218 = vst.msk [vmem:[#allocation2] sm:$0xff] %vm217, %v215
        %219 = vst.msk [vmem:[#allocation2 + $0x8] sm:$0xff] %vm217, %v216
        %s220 = sadd.s32 %s213, 1
        %s221 = scalar_lea.vmem %s210, %s220
        %v222 = vld [vmem:[%s221] sm:$0xff]
        %v223 = vld [vmem:[%s221 + $0x8] sm:$0xff]
        %226 = vrot.lane.b32.xlu0 %v222, 16
        %v227 = vpop.permute.xlu0 %226
        %228 = vrot.lane.b32.xlu0 %v223, 16
        %v229 = vpop.permute.xlu0 %228
        %vm232 = vcmask 261248
        %233 = vst.msk [vmem:[#allocation2] sm:$0xff] %vm232, %v227
        %234 = vst.msk [vmem:[#allocation2 + $0x8] sm:$0xff] %vm232, %v229
        %s235 = sadd.s32 %s213, 2
        %s236 = scalar_lea.vmem %s210, %s235
        %v237 = vld [vmem:[%s236] sm:$0xff]
        %v238 = vld [vmem:[%s236 + $0x8] sm:$0xff]
        %241 = vrot.lane.b32.xlu0 %v237, 32
        %v242 = vpop.permute.xlu0 %241
        %243 = vrot.lane.b32.xlu0 %v238, 32
        %v244 = vpop.permute.xlu0 %243
        %vm247 = vcmask 392448
        %248 = vst.msk [vmem:[#allocation2] sm:$0xff] %vm247, %v242
        %249 = vst.msk [vmem:[#allocation2 + $0x8] sm:$0xff] %vm247, %v244
        %s250 = sadd.s32 %s213, 3
        %s251 = scalar_lea.vmem %s210, %s250
        %v252 = vld [vmem:[%s251] sm:$0xff]
        %v253 = vld [vmem:[%s251 + $0x8] sm:$0xff]
        %256 = vrot.lane.b32.xlu0 %v252, 48
        %v257 = vpop.permute.xlu0 %256
        %258 = vrot.lane.b32.xlu0 %v253, 48
        %v259 = vpop.permute.xlu0 %258
        %vm262 = vcmask 523648
        %263 = vst.msk [vmem:[#allocation2] sm:$0xff] %vm262, %v257
        %264 = vst.msk [vmem:[#allocation2 + $0x8] sm:$0xff] %vm262, %v259
        %v265 = vld [vmem:[#allocation2] sm:$0xff]
        %v266 = vld [vmem:[#allocation2 + $0x8] sm:$0xff]
        %v267 = vld [vmem:[#allocation3] sm:$0xff]
        %v268 = vld [vmem:[#allocation3 + $0x8] sm:$0xff]
        %v269 = vld [vmem:[#allocation3 + $0x10] sm:$0xff]
        %v270 = vld [vmem:[#allocation3 + $0x18] sm:$0xff]
        %v271 = vld [vmem:[#allocation3 + $0x20] sm:$0xff]
        %v272 = vld [vmem:[#allocation3 + $0x28] sm:$0xff]
        %v273 = vld [vmem:[#allocation3 + $0x30] sm:$0xff]
        %v274 = vld [vmem:[#allocation3 + $0x38] sm:$0xff]
        %v275 = vld [vmem:[#allocation3 + $0x40] sm:$0xff]
        %v276 = vld [vmem:[#allocation3 + $0x48] sm:$0xff]
        %v277 = vld [vmem:[#allocation3 + $0x50] sm:$0xff]
        %v278 = vld [vmem:[#allocation3 + $0x58] sm:$0xff]
        %v279 = vld [vmem:[#allocation3 + $0x60] sm:$0xff]
        %v280 = vld [vmem:[#allocation3 + $0x68] sm:$0xff]
        %v281 = vld [vmem:[#allocation3 + $0x70] sm:$0xff]
        %v282 = vld [vmem:[#allocation3 + $0x78] sm:$0xff]
        %vm283 = vcmask 523264
        %v285 = vsel %vm283, %v265, 0
        %v288 = vsel %vm283, %v266, 0
        %290 = vmatprep.subr.mxu0 %v268
        %291 = vmatpush1.msra.mxu0 %v267
        %292 = vmatprep.subr.mxu0 %v270
        %293 = vmatpush1.msra.mxu0 %v269
        %294 = vmatprep.subr.mxu0 %v272
        %295 = vmatpush1.msra.mxu0 %v271
        %296 = vmatprep.subr.mxu0 %v274
        %297 = vmatpush1.msra.mxu0 %v273
        %298 = vmatprep.subr.mxu0 %v276
        %299 = vmatpush1.msra.mxu0 %v275
        %300 = vmatprep.subr.mxu0 %v278
        %301 = vmatpush1.msra.mxu0 %v277
        %302 = vmatprep.subr.mxu0 %v280
        %303 = vmatpush1.msra.mxu0 %v279
        %304 = vmatprep.subr.mxu0 %v282
        %305 = vmatpush1.msra.mxu0 %v281
        %306 = vmatprep.subr.mxu0 0.0
        %307 = vmatpush1.msra.mxu0 0.0
        %308 = vmatprep.subr.mxu0 0.0
        %309 = vmatpush1.msra.mxu0 0.0
        %310 = vmatprep.subr.mxu0 0.0
        %311 = vmatpush1.msra.mxu0 0.0
        %312 = vmatprep.subr.mxu0 0.0
        %313 = vmatpush1.msra.mxu0 0.0
        %314 = vmatprep.subr.mxu0 0.0
        %315 = vmatpush1.msra.mxu0 0.0
        %316 = vmatprep.subr.mxu0 0.0
        %317 = vmatpush1.msra.mxu0 0.0
        %318 = vmatprep.subr.mxu0 0.0
        %319 = vmatpush1.msra.mxu0 0.0
        %320 = vmatprep.subr.mxu0 0.0
        %321 = vmatpush1.msra.mxu0 0.0
        %322 = vmatprep.subr.mxu0 0.0
        %323 = vmatpush1.msra.mxu0 0.0
        %324 = vmatprep.subr.mxu0 0.0
        %325 = vmatpush1.msra.mxu0 0.0
        %326 = vmatprep.subr.mxu0 0.0
        %327 = vmatpush1.msra.mxu0 0.0
        %328 = vmatprep.subr.mxu0 0.0
        %329 = vmatpush1.msra.mxu0 0.0
        %330 = vmatprep.subr.mxu0 0.0
        %331 = vmatpush1.msra.mxu0 0.0
        %332 = vmatprep.subr.mxu0 0.0
        %333 = vmatpush1.msra.mxu0 0.0
        %334 = vmatprep.subr.mxu0 0.0
        %335 = vmatpush1.msra.mxu0 0.0
        %336 = vmatprep.subr.mxu0 0.0
        %337 = vmatpush1.msra.mxu0 0.0
        %338 = vmatprep.subr.mxu0 0.0
        %339 = vmatpush1.msra.mxu0 0.0
        %340 = vmatprep.subr.mxu0 0.0
        %341 = vmatpush1.msra.mxu0 0.0
        %342 = vmatprep.subr.mxu0 0.0
        %343 = vmatpush1.msra.mxu0 0.0
        %344 = vmatprep.subr.mxu0 0.0
        %345 = vmatpush1.msra.mxu0 0.0
        %346 = vmatprep.subr.mxu0 0.0
        %347 = vmatpush1.msra.mxu0 0.0
        %348 = vmatprep.subr.mxu0 0.0
        %349 = vmatpush1.msra.mxu0 0.0
        %350 = vmatprep.subr.mxu0 0.0
        %351 = vmatpush1.msra.mxu0 0.0
        %352 = vmatprep.subr.mxu0 0.0
        %353 = vmatpush1.msra.mxu0 0.0
        %354 = vmatprep.mubr.f32.mxu0 0.0
        %355 = vmatmul.mubr.f32.gmra.mrb[0].mxu0 %v285
        %v356 = vpop.f32.mrb[0].mxu0
        %v357 = vadd.f32 0.0, %v356
        %v358 = vpop.f32.mrb[0].mxu0
        %v359 = vadd.f32 0.0, %v358
        %360 = vmatprep.mubr.f32.mxu0 0.0
        %361 = vmatmul.mubr.f32.gmra.mrb[0].mxu0 %v288
        %v362 = vpop.f32.mrb[0].mxu0
        %v363 = vadd.f32 0.0, %v362
        %v364 = vpop.f32.mrb[0].mxu0
        %v365 = vadd.f32 0.0, %v364
        %366 = vdwg.mxu0
        %367 = vst [vmem:[%s198] sm:$0xff] %v357
        %368 = vst [vmem:[%s198 + $0x8] sm:$0xff] %v363
        %369 = vst [vmem:[%s205] sm:$0xff] %v359
        %370 = vst [vmem:[%s205 + $0x8] sm:$0xff] %v365
        %s371 = sand.u32 %s91, 1
        %s372 = scalar_lea.sflag [#allocation5], %s371
        %s373 = sand.u32 %s91, 1
        %s374 = smul.addr %s373, 16
        %s375 = scalar_lea.vmem [#allocation6], %s374
        %s376 = sand.u32 %s119, 1
        %s377 = scalar_lea.sflag [#allocation8], %s376
        %s378 = sand.u32 %s119, 1
        %s379 = smul.addr %s378, 16
        %s380 = scalar_lea.vmem [#allocation7], %s379
        // Predicated region
        $region33: #{tpu_custom_call.1} parent=27 // pred_check
          %p381 = pneg %p101
        $region34: #{tpu_custom_call.1} parent=27 // pred_check_branch
          %383 = sbr.rel (%p381) target = $region36
        $region35: #{tpu_custom_call.1} parent=27 // pred_region
          %s384 = smul.u32 2, %s27
          %s386 = ssub.s32 256, 256
          %387 = vsyncadd %s372, %s386
          %s388 = smul.addr %s26, 2
          %s389 = sadd.s32 %s384, %s388
          %s390 = smul.addr %s389, 128
          %s391 = scalar_lea.hbm %s2, %s390
          %s392 = sshll.u32 %s375, 4
          %s393 = int_to_ptr.vmem [resolvable:$true] %s392
          %398 = dma.vmem_to_hbm [thread:$0]  %s393, 256, %s391, %s372, 128, 128, 8
        $region36: #{tpu_custom_call.1} parent=27 // pred_fallthru
          _
        // Predicated region
        $region37: #{tpu_custom_call.1} parent=27 // pred_check
          %p399 = pneg %p129
        $region38: #{tpu_custom_call.1} parent=27 // pred_check_branch
          %401 = sbr.rel (%p399) target = $region40
        $region39: #{tpu_custom_call.1} parent=27 // pred_region
          %s402 = smul.u32 2, %s27
          %s404 = ssub.s32 256, 256
          %405 = vsyncadd %s377, %s404
          %s406 = smul.addr %s26, 2
          %s407 = sadd.s32 %s402, %s406
          %s408 = smul.addr %s407, 128
          %s409 = scalar_lea.hbm %s3, %s408
          %s410 = sshll.u32 %s380, 4
          %s411 = int_to_ptr.vmem [resolvable:$true] %s410
          %416 = dma.vmem_to_hbm [thread:$0]  %s411, 256, %s409, %s377, 128, 128, 8
        $region40: #{tpu_custom_call.1} parent=27 // pred_fallthru
          _
      $region28: #{tpu_custom_call.1} parent=5 // pred_fallthru
        _
      %p417 = scmp.le.s32.totalorder 2, %s17
      // Predicated region
      $region41: #{tpu_custom_call.1} parent=5 // pred_check
        %p418 = pneg %p417
      $region42: #{tpu_custom_call.1} parent=5 // pred_check_branch
        %420 = sbr.rel (%p418) target = $region44
      $region43: #{tpu_custom_call.1} parent=5 // pred_region
        %s421 = ssub.s32 %s17, 2
        // Predicated region
        $region45: #{tpu_custom_call.1} parent=43 // pred_check
          %p422 = pneg %p107
        $region46: #{tpu_custom_call.1} parent=43 // pred_check_branch
          %424 = sbr.rel (%p422) target = $region48
        $region47: #{tpu_custom_call.1} parent=43 // pred_region
          %s425 = sand.u32 %s92, 1
          %s426 = scalar_lea.sflag [#allocation5], %s425
          %s427 = sand.u32 %s92, 1
          %s428 = smul.addr %s427, 16
          %s429 = scalar_lea.vmem [#allocation6], %s428
          %430 = dma.done %s426, 256
        $region48: #{tpu_custom_call.1} parent=43 // pred_fallthru
          _
        // Predicated region
        $region49: #{tpu_custom_call.1} parent=43 // pred_check
          %p431 = pneg %p135
        $region50: #{tpu_custom_call.1} parent=43 // pred_check_branch
          %433 = sbr.rel (%p431) target = $region52
        $region51: #{tpu_custom_call.1} parent=43 // pred_region
          %s434 = sand.u32 %s120, 1
          %s435 = scalar_lea.sflag [#allocation8], %s434
          %s436 = sand.u32 %s120, 1
          %s437 = smul.addr %s436, 16
          %s438 = scalar_lea.vmem [#allocation7], %s437
          %439 = dma.done %s435, 256
        $region52: #{tpu_custom_call.1} parent=43 // pred_fallthru
          _
      $region44: #{tpu_custom_call.1} parent=5 // pred_fallthru
        _
    $region6: #{tpu_custom_call.1} parent=1 // loop_footer
      %s21 = sadd.s32 1, %s17
    $region7: #{tpu_custom_call.1} parent=1 // loop_footer_branch
      %16 = sbr.rel target = $region3
    $region8: #{tpu_custom_call.1} parent=1 // loop_exit
      _
    %440 = vsyncpa [#allocation4], 1
    %s441 = scalar_lea.sflag [#allocation4], 1
    %442 = vsyncpa %s441, 1
    %443 = vsyncpa [#allocation5], 1
    %s444 = scalar_lea.sflag [#allocation5], 1
    %445 = vsyncpa %s444, 1
    %446 = vsyncpa [#allocation8], 1
    %s447 = scalar_lea.sflag [#allocation8], 1
    %448 = vsyncpa %s447, 1

</llo_original>
